<compile_context>
chip_gen: v5e
topology: v5e:2x2
jax: 0.10.0
libtpu: 0.0.40
codegen_flags: <defaults>
</compile_context>

<pallas_src>
import numpy as np
import jax
import jax.numpy as jnp
from jax.experimental import pallas as pl
from jax.experimental.pallas import tpu as pltpu


NUM_OUTPUTS = 75   # the torch module hard-codes a 75-wide output


# ------------------------------ Pallas kernel ------------------------------ #

def _fused_mlp_kernel(x_ref, w1_ref, b1_ref, w2_ref, b2_ref, o_ref):
    # x:  (TB, F)  native dtype   w1: (F, Hp) bf16    b1: (1, Hp)  f32
    # w2: (Hp, OUTP) bf16         b2: (1, OUTP) f32   o:  (TB, OUTP) f32
    x = x_ref[...].astype(jnp.bfloat16)                      # cast in-kernel (no HBM copy)
    h = jnp.dot(x, w1_ref[...], preferred_element_type=jnp.float32)
    h = jnp.maximum(h + b1_ref[...], 0.0)                    # f32 bias-add + ReLU (VPU)
    o = jnp.dot(h.astype(jnp.bfloat16), w2_ref[...],
                preferred_element_type=jnp.float32)
    o_ref[...] = o + b2_ref[...]


def fused_mlp(x, w1_all, b1_all, w2_all, b2_all, *, max_rows_per_tile=1024):
    """Row-tiled over the batch; packed weights stay VMEM-resident across the grid."""
    B, F = x.shape
    HP = w1_all.shape[1]
    OUTP = w2_all.shape[1]

    # Row tile: whole (sublane-rounded) batch if small, else a fixed large tile.
    # TB=1024 -> x 128KiB + out 512KiB (double-buffered) + (TB,512) f32 hidden ~2MiB:
    # fits v5e's 16 MiB default scoped VMEM; v6e/v7x could go larger.
    if B <= max_rows_per_tile:
        tb = max(8, ((B + 7) // 8) * 8)
    else:
        tb = max_rows_per_tile
    bp = ((B + tb - 1) // tb) * tb
    if bp != B:
        x = jnp.pad(x, ((0, bp - B), (0, 0)))                # only the ragged tail tile

    resident = lambda i: (0, 0)                              # same block every step -> 1 DMA
    out = pl.pallas_call(
        _fused_mlp_kernel,
        out_shape=jax.ShapeDtypeStruct((bp, OUTP), jnp.float32),
        grid=(bp // tb,),
        in_specs=[
            pl.BlockSpec((tb, F), lambda i: (i, 0)),         # batch tile
            pl.BlockSpec((F, HP), resident),                 # packed first layer (bf16)
            pl.BlockSpec((1, HP), resident),                 # packed first bias  (f32)
            pl.BlockSpec((HP, OUTP), resident),              # packed second layer (bf16)
            pl.BlockSpec((1, OUTP), resident),               # packed second bias (f32)
        ],
        out_specs=pl.BlockSpec((tb, OUTP), lambda i: (i, 0)),
        compiler_params=pltpu.CompilerParams(
            dimension_semantics=("parallel",)),              # v7x: 2 TCs split the batch
    )(x, w1_all, b1_all, w2_all, b2_all)
    return out[:B]


# --------------------- static packing of the in_out_map --------------------- #

def _branch_of(i):
    # identical branching to the torch forward
    return 0 if i < 15 else (1 if i < 25 else 2)


def build_static_packing(in_out_map, num_features, input_num=3, num_outputs=NUM_OUTPUTS):
    """Trace-time metadata derived from the (static) in_out_map only."""
    E = len(in_out_map)
    DMAX = 3 * input_num           # spinal input width (the widest of the three MLPs)
    HMAX = 2 * input_num           # nfn/ss hidden width (the widest hidden layer)
    branch_idx = np.array([_branch_of(i) for i in range(E)], dtype=np.int32)

    # per-entry gathered-feature indices, padded to DMAX (pad slots carry zero weights)
    k_pad = np.zeros((E, DMAX), dtype=np.int32)
    owner = {}                     # output column -> entry that writes it LAST (torch setitem)
    for i, (k, v) in enumerate(in_out_map):
        k_list = [k] if isinstance(k, (int, np.integer)) else list(k)
        for j, f in enumerate(k_list):
            k_pad[i, j] = int(f)
        v_list = [v] if isinstance(v, (int, np.integer)) else list(v)
        for c in v_list:
            owner[int(c)] = i

    outp = ((num_outputs + 127) // 128) * 128          # lane-dense padded output width
    vmat = np.zeros((E, outp), dtype=np.float32)       # vmat[e, c] = 1 iff entry e owns col c
    for c, e in owner.items():
        vmat[e, c] = 1.0

    htot = E * HMAX
    hp = ((htot + 127) // 128) * 128
    return dict(E=E, DMAX=DMAX, HMAX=HMAX, HTOT=htot, HP=hp, OUTP=outp,
                branch_idx=branch_idx, k_pad=k_pad, vmat=vmat)


def pack_params(params, c, num_features):
    """Fold gathers + both Linear layers + the output scatter into 4 packed operands.

    Runs ONCE, entirely in NumPy (no per-call XLA ops); exact zero-pad + index scatter."""
    E, DMAX, HMAX = c["E"], c["DMAX"], c["HMAX"]
    HTOT, HP, OUTP = c["HTOT"], c["HP"], c["OUTP"]
    bidx = c["branch_idx"]

    def pad_w1(w):      # (d, h) -> (DMAX, HMAX), zero padded
        w = np.asarray(w, np.float32)
        out = np.zeros((DMAX, HMAX), np.float32)
        out[: w.shape[0], : w.shape[1]] = w
        return out

    def pad_vec(v, n):  # (m,) -> (n,), zero padded
        v = np.asarray(v, np.float32)
        out = np.zeros((n,), np.float32)
        out[: v.shape[0]] = v
        return out

    order = ("spinal", "nfn", "ss")
    w1_stack = np.stack([pad_w1(params[k]["w1"]) for k in order])                       # (3, DMAX, HMAX)
    b1_stack = np.stack([pad_vec(params[k]["b1"], HMAX) for k in order])                # (3, HMAX)
    w2_stack = np.stack([pad_vec(np.asarray(params[k]["w2"])[:, 0], HMAX) for k in order])  # (3, HMAX)
    b2_stack = np.array([np.asarray(params[k]["b2"], np.float32)[0] for k in order])    # (3,)

    w1_pe = w1_stack[bidx]     # (E, DMAX, HMAX) per-entry (branch-selected) first layer
    b1_pe = b1_stack[bidx]     # (E, HMAX)
    w2_pe = w2_stack[bidx]     # (E, HMAX)
    b2_pe = b2_stack[bidx]     # (E,)

    # Fold the static per-entry feature gather x[:, k] into the first-layer weights:
    #   w1_scat[e, f, t] = sum_j [k_e[j] == f] * w1_pe[e, j, t]
    w1_scat = np.zeros((E, num_features, HMAX), np.float32)
    rows = np.arange(E)[:, None]
    np.add.at(w1_scat, (rows, c["k_pad"]), w1_pe)
    w1_all = np.transpose(w1_scat, (1, 0, 2)).reshape(num_features, HTOT)
    w1_all = np.pad(w1_all, ((0, 0), (0, HP - HTOT)))                                   # (F, Hp)

    b1_all = np.pad(b1_pe.reshape(HTOT), (0, HP - HTOT))[None, :]                       # (1, Hp)

    # Fold the second Linear AND the output[:, v] column scatter into one matrix.
    vmat = c["vmat"]                                                                     # (E, OUTP)
    w2_all = (w2_pe[:, :, None] * vmat[:, None, :]).reshape(HTOT, OUTP)
    w2_all = np.pad(w2_all, ((0, HP - HTOT), (0, 0)))                                   # (Hp, OUTP)

    b2_all = np.sum(b2_pe[:, None] * vmat, axis=0)[None, :]                             # (1, OUTP)
    return w1_all, b1_all, w2_all, b2_all


def make_forward(in_out_map, num_features, params, input_num=3, num_outputs=NUM_OUTPUTS):
    """Pack the (frozen) params once; return a jitted forward(x) whose per-call work is
    exactly the fused Pallas kernel plus a slice."""
    c = build_static_packing(in_out_map, num_features, input_num, num_outputs)
    w1_np, b1_np, w2_np, b2_np = pack_params(params, c, num_features)
    w1_all = jnp.asarray(w1_np, jnp.bfloat16)     # MXU operands in bf16
    w2_all = jnp.asarray(w2_np, jnp.bfloat16)
    b1_all = jnp.asarray(b1_np, jnp.float32)      # biases stay f32 (VPU adds)
    b2_all = jnp.asarray(b2_np, jnp.float32)

    @jax.jit
    def forward(x):
        out_padded = fused_mlp(x, w1_all, b1_all, w2_all, b2_all)
        return out_padded[:, :num_outputs]        # drop the lane padding (75 of 128)

    return forward


# ------------------------------ params & reference -------------------------- #

def init_params(key, input_num=3):
    """nn.Linear-style init; weights stored as (in, out)."""
    def linear(k, fan_in, fan_out):
        kw, kb = jax.random.split(k)
        bound = 1.0 / np.sqrt(fan_in)
        w = jax.random.uniform(kw, (fan_in, fan_out), jnp.float32, -bound, bound)
        b = jax.random.uniform(kb, (fan_out,), jnp.float32, -bound, bound)
        return w, b

    ks = jax.random.split(key, 6)
    w1s, b1s = linear(ks[0], input_num * 3, input_num)
    w2s, b2s = linear(ks[1], input_num, 1)
    w1n, b1n = linear(ks[2], input_num, input_num * 2)
    w2n, b2n = linear(ks[3], input_num * 2, 1)
    w1e, b1e = linear(ks[4], input_num, input_num * 2)
    w2e, b2e = linear(ks[5], input_num * 2, 1)
    return {
        "spinal": {"w1": w1s, "b1": b1s, "w2": w2s, "b2": b2s},
        "nfn":    {"w1": w1n, "b1": b1n, "w2": w2n, "b2": b2n},
        "ss":     {"w1": w1e, "b1": b1e, "w2": w2e, "b2": b2e},
    }


def ref_forward(x, params, in_out_map, num_outputs=NUM_OUTPUTS):
    """Literal NumPy transcription of the torch forward (incl. last-write-wins setitem)."""
    x = np.asarray(x, np.float32)
    out = np.zeros((x.shape[0], num_outputs), np.float32)

    def mlp(xk, p):
        h = np.maximum(xk @ np.asarray(p["w1"]) + np.asarray(p["b1"]), 0.0)
        return h @ np.asarray(p["w2"]) + np.asarray(p["b2"])                 # (B, 1)

    for i, (k, v) in enumerate(in_out_map):
        cols = np.asarray(k, dtype=np.int64)
        if i < 15:
            o = mlp(x[:, cols], params["spinal"])
        elif i < 25:
            o = mlp(x[:, cols], params["nfn"])
        else:
            o = mlp(x[:, cols], params["ss"])
        v_list = [v] if isinstance(v, (int, np.integer)) else list(v)
        out[:, v_list] = o                                                   # broadcast over cols
    return out


# ----------------------------------- main ----------------------------------- #

if __name__ == "__main__":
    B, F, input_num = 2, 32, 3
    key = jax.random.PRNGKey(0)
    k_params, k_x = jax.random.split(key)

    params = init_params(k_params, input_num)
    x = jax.random.normal(k_x, (B, F), dtype=jnp.float32)

    # Synthetic in_out_map with the same branching as the real model:
    #   entries  0..14 -> mlp_spinal (gather 9 feature columns each)
    #   entries 15..24 -> mlp_nfn    (gather 3 feature columns each)
    #   entries 25..74 -> mlp_ss     (gather 3 feature columns each)
    # every output column 0..74 written exactly once via a non-identity permutation.
    in_out_map = []
    for i in range(75):
        if i < 15:
            k = [(5 * i + 7 * j) % F for j in range(9)]
        else:
            k = [(3 * i + j) % F for j in range(3)]
        v = [(7 * i) % NUM_OUTPUTS]
        in_out_map.append((k, v))

    forward = make_forward(in_out_map, num_features=F, params=params, input_num=input_num)
    out = jax.block_until_ready(forward(x))

    ref = ref_forward(x, params, in_out_map)
    # bf16 MXU operands with f32 accumulation -> ~0.4% relative operand rounding.
    np.testing.assert_allclose(np.asarray(out), ref, rtol=2e-2, atol=2e-2)
    print("KERNEL_OK")
</pallas_src>

<mosaic_0001>
module attributes {stable_mosaic.version = 11 : i64} {
  func.func @_fused_mlp_kernel(%arg0: i32, %arg1: memref<8x32xf32, #tpu.memory_space<vmem>>, %arg2: memref<32x512xbf16, #tpu.memory_space<vmem>>, %arg3: memref<1x512xf32, #tpu.memory_space<vmem>>, %arg4: memref<512x128xbf16, #tpu.memory_space<vmem>>, %arg5: memref<1x128xf32, #tpu.memory_space<vmem>>, %arg6: memref<8x128xf32, #tpu.memory_space<vmem>>) attributes {dimension_semantics = [#tpu.dimension_semantics<parallel>], iteration_bounds = array<i64: 1>, scalar_prefetch = 0 : i64, scratch_operands = 0 : i64, tpu.core_type = #tpu.core_type<tc>, window_params = [{transform_indices = @transform_0, window_bounds = array<i64: 8, 32>}, {pipeline_mode = #tpu.pipeline_mode<synchronous>, transform_indices = @transform_1, window_bounds = array<i64: 32, 512>}, {pipeline_mode = #tpu.pipeline_mode<synchronous>, transform_indices = @transform_2, window_bounds = array<i64: 1, 512>}, {pipeline_mode = #tpu.pipeline_mode<synchronous>, transform_indices = @transform_3, window_bounds = array<i64: 512, 128>}, {pipeline_mode = #tpu.pipeline_mode<synchronous>, transform_indices = @transform_4, window_bounds = array<i64: 1, 128>}, {transform_indices = @transform_5, window_bounds = array<i64: 8, 128>}]} {
    %c0 = arith.constant 0 : index
    %c0_0 = arith.constant 0 : index
    %0 = vector.load %arg1[%c0, %c0_0] : memref<8x32xf32, #tpu.memory_space<vmem>>, vector<8x32xf32>
    %1 = arith.truncf %0 : vector<8x32xf32> to vector<8x32xbf16>
    %c0_1 = arith.constant 0 : index
    %c0_2 = arith.constant 0 : index
    %2 = vector.load %arg2[%c0_1, %c0_2] : memref<32x512xbf16, #tpu.memory_space<vmem>>, vector<32x512xbf16>
    %cst = arith.constant dense<0.000000e+00> : vector<8x512xf32>
    %3 = tpu.matmul %1, %2, %cst {dimension_numbers = #tpu.dot_dimension_numbers<[1], [0], [0], [1], [0, 0, 1, 1], [], []>} : vector<8x32xbf16>, vector<32x512xbf16>, vector<8x512xf32> -> vector<8x512xf32>
    %c0_3 = arith.constant 0 : index
    %c0_4 = arith.constant 0 : index
    %4 = vector.load %arg3[%c0_3, %c0_4] : memref<1x512xf32, #tpu.memory_space<vmem>>, vector<1x512xf32>
    %5 = vector.broadcast %4 : vector<1x512xf32> to vector<8x512xf32>
    %6 = arith.addf %3, %5 : vector<8x512xf32>
    %cst_5 = arith.constant 0.000000e+00 : f32
    %7 = vector.broadcast %cst_5 : f32 to vector<8x512xf32>
    %8 = arith.maximumf %6, %7 : vector<8x512xf32>
    %9 = arith.truncf %8 : vector<8x512xf32> to vector<8x512xbf16>
    %c0_6 = arith.constant 0 : index
    %c0_7 = arith.constant 0 : index
    %10 = vector.load %arg4[%c0_6, %c0_7] : memref<512x128xbf16, #tpu.memory_space<vmem>>, vector<512x128xbf16>
    %cst_8 = arith.constant dense<0.000000e+00> : vector<8x128xf32>
    %11 = tpu.matmul %9, %10, %cst_8 {dimension_numbers = #tpu.dot_dimension_numbers<[1], [0], [0], [1], [0, 0, 1, 1], [], []>} : vector<8x512xbf16>, vector<512x128xbf16>, vector<8x128xf32> -> vector<8x128xf32>
    %c0_9 = arith.constant 0 : index
    %c0_10 = arith.constant 0 : index
    %12 = vector.load %arg5[%c0_9, %c0_10] : memref<1x128xf32, #tpu.memory_space<vmem>>, vector<1x128xf32>
    %13 = vector.broadcast %12 : vector<1x128xf32> to vector<8x128xf32>
    %14 = arith.addf %11, %13 : vector<8x128xf32>
    %c0_11 = arith.constant 0 : index
    %c0_12 = arith.constant 0 : index
    %15 = vector.load %arg6[%c0_11, %c0_12] : memref<8x128xf32, #tpu.memory_space<vmem>>, vector<8x128xf32>
    tpu.vector_store %arg6[%c0_11, %c0_12], %14 {strides = array<i32>} : memref<8x128xf32, #tpu.memory_space<vmem>>, vector<8x128xf32>,
    return
  }
  func.func @transform_0(%arg0: i32) -> (i32, i32) {
    %c0_i32 = arith.constant 0 : i32
    %c0_i32_0 = arith.constant 0 : i32
    return %arg0, %c0_i32 : i32, i32
  }
  func.func @transform_1(%arg0: i32) -> (i32, i32) {
    %c0_i32 = arith.constant 0 : i32
    %c0_i32_0 = arith.constant 0 : i32
    %c0_i32_1 = arith.constant 0 : i32
    return %c0_i32, %c0_i32_0 : i32, i32
  }
  func.func @transform_2(%arg0: i32) -> (i32, i32) {
    %c0_i32 = arith.constant 0 : i32
    %c0_i32_0 = arith.constant 0 : i32
    %c0_i32_1 = arith.constant 0 : i32
    return %c0_i32, %c0_i32_0 : i32, i32
  }
  func.func @transform_3(%arg0: i32) -> (i32, i32) {
    %c0_i32 = arith.constant 0 : i32
    %c0_i32_0 = arith.constant 0 : i32
    %c0_i32_1 = arith.constant 0 : i32
    return %c0_i32, %c0_i32_0 : i32, i32
  }
  func.func @transform_4(%arg0: i32) -> (i32, i32) {
    %c0_i32 = arith.constant 0 : i32
    %c0_i32_0 = arith.constant 0 : i32
    %c0_i32_1 = arith.constant 0 : i32
    return %c0_i32, %c0_i32_0 : i32, i32
  }
  func.func @transform_5(%arg0: i32) -> (i32, i32) {
    %c0_i32 = arith.constant 0 : i32
    %c0_i32_0 = arith.constant 0 : i32
    return %arg0, %c0_i32 : i32, i32
  }
}

</mosaic_0001>

<llo_original>
// kernel: forward.1
$region0: #{forward.1}
  #allocation0 [shape = 'u32[]', space=smem, size = 0x4, offset = 0x4, fixed_abs, tag = 'smem constant byte address 0x4 - core index']
  #allocation1 [shape = 'u32[72,128]{1,0:T(1,128)}', space=vmem, size = 0x9000, scoped, tag = 'internal scratch']
  %s0 = inlined_call_operand.vmem [shape: f32[8,32], index: 0, kind: input, shape index: {}]
  %s1 = inlined_call_operand.hbm [shape: bf16[32,512], index: 1, kind: input, shape index: {}]
  %s2 = inlined_call_operand.vmem [shape: f32[1,512], index: 2, kind: input, shape index: {}]
  %s3 = inlined_call_operand.hbm [shape: bf16[512,128], index: 3, kind: input, shape index: {}]
  %s4 = inlined_call_operand.vmem [shape: f32[1,128], index: 4, kind: input, shape index: {}]
  %s5 = inlined_call_operand.vmem [shape: f32[8,128], index: 5, kind: output, shape index: {}]
  %s6 = sld [smem:[#allocation0]]
  $region38: #{forward.1} parent=0
    _
  %s8 = ssub.s32 1, %s6
  %s9 = scalar_select 0, %s8, %s6
  $region1: #{forward.1} parent=0
    #allocation2 [shape = 'u8[32768]{0}', space=vmem, size = 0x8000, scoped, tag = 'input window, operand 1, single buffered']
    #allocation3 [shape = 's32[1]{0}', space=sflag, size = 0x4, scoped, tag = 'scoped memory for forward.1']
    #allocation4 [shape = 'u8[131072]{0}', space=vmem, size = 0x20000, scoped, tag = 'input window, operand 3, single buffered']
    #allocation5 [shape = 's32[1]{0}', space=sflag, size = 0x4, scoped, tag = 'scoped memory for forward.1']
    %10 = vsyncpa [#allocation3], 0
    %11 = vsyncpa [#allocation5], 0
    // Predicated region
    $region2: #{forward.1} parent=1 // pred_check
      _
    $region3: #{forward.1} parent=1 // pred_check_branch
      %13 = sbr.rel (0) target = $region5
    $region4: #{forward.1} parent=1 // pred_region
      _
    $region5: #{forward.1} parent=1 // pred_fallthru
      _
    // Predicated region
    $region6: #{forward.1} parent=1 // pred_check
      _
    $region7: #{forward.1} parent=1 // pred_check_branch
      %15 = sbr.rel (0) target = $region9
    $region8: #{forward.1} parent=1 // pred_region
      %17 = vsyncadd [#allocation3], 0
      %s18 = sshll.u32 %s1, 4
      %s19 = int_to_ptr.hbm [resolvable:$true] %s18
      %s20 = sshll.u32 [#allocation2], 4
      %s21 = int_to_ptr.vmem [resolvable:$true] %s20
      %26 = dma.hbm_to_vmem [thread:$0]  %s19, 1024, %s21, [#allocation3], 256, 256, 16
    $region9: #{forward.1} parent=1 // pred_fallthru
      _
    // Predicated region
    $region10: #{forward.1} parent=1 // pred_check
      _
    $region11: #{forward.1} parent=1 // pred_check_branch
      %28 = sbr.rel (0) target = $region13
    $region12: #{forward.1} parent=1 // pred_region
      _
    $region13: #{forward.1} parent=1 // pred_fallthru
      _
    // Predicated region
    $region14: #{forward.1} parent=1 // pred_check
      _
    $region15: #{forward.1} parent=1 // pred_check_branch
      %30 = sbr.rel (0) target = $region17
    $region16: #{forward.1} parent=1 // pred_region
      %32 = vsyncadd [#allocation5], 0
      %s33 = sshll.u32 %s3, 4
      %s34 = int_to_ptr.hbm [resolvable:$true] %s33
      %s35 = sshll.u32 [#allocation4], 4
      %s36 = int_to_ptr.vmem [resolvable:$true] %s35
      %41 = dma.hbm_to_vmem [thread:$0]  %s34, 4096, %s36, [#allocation5], 64, 64, 4
    $region17: #{forward.1} parent=1 // pred_fallthru
      _
    // Predicated region
    $region18: #{forward.1} parent=1 // pred_check
      _
    $region19: #{forward.1} parent=1 // pred_check_branch
      %43 = sbr.rel (0) target = $region21
    $region20: #{forward.1} parent=1 // pred_region
      _
    $region21: #{forward.1} parent=1 // pred_fallthru
      _
    // Predicated region
    $region22: #{forward.1} parent=1 // pred_check
      _
    $region23: #{forward.1} parent=1 // pred_check_branch
      %45 = sbr.rel (0) target = $region25
    $region24: #{forward.1} parent=1 // pred_region
      %47 = dma.done [#allocation3], 1024
    $region25: #{forward.1} parent=1 // pred_fallthru
      _
    // Predicated region
    $region26: #{forward.1} parent=1 // pred_check
      _
    $region27: #{forward.1} parent=1 // pred_check_branch
      %49 = sbr.rel (0) target = $region29
    $region28: #{forward.1} parent=1 // pred_region
      %51 = dma.done [#allocation5], 4096
    $region29: #{forward.1} parent=1 // pred_fallthru
      _
    %v53 = vld [vmem:[%s0] sm:$0xff]
    %v54 = vpack.c.bf16 %v53, %v53
    %v55 = vld [vmem:[#allocation2] sm:$0xff]
    %v56 = vld [vmem:[#allocation2 + $0x8] sm:$0xff]
    %v57 = vld [vmem:[#allocation2 + $0x10] sm:$0xff]
    %v58 = vld [vmem:[#allocation2 + $0x18] sm:$0xff]
    %v59 = vld [vmem:[#allocation2 + $0x20] sm:$0xff]
    %v60 = vld [vmem:[#allocation2 + $0x28] sm:$0xff]
    %v61 = vld [vmem:[#allocation2 + $0x30] sm:$0xff]
    %v62 = vld [vmem:[#allocation2 + $0x38] sm:$0xff]
    %v63 = vld [vmem:[%s2] sm:$0xf]
    %v65 = vperm.slane %v63, 0
    %v66 = vperm.slane %v63, 1
    %v67 = vperm.slane %v63, 2
    %v68 = vperm.slane %v63, 3
    %v81 = vunpack.c.l.b16 %v55
    %v82 = vunpack.c.h.b16 %v55
    %v83 = vunpack.c.l.b16 %v56
    %v84 = vunpack.c.h.b16 %v56
    %v85 = vunpack.c.l.b16 %v57
    %v86 = vunpack.c.h.b16 %v57
    %v87 = vunpack.c.l.b16 %v58
    %v88 = vunpack.c.h.b16 %v58
    %v89 = vunpack.c.l.b16 %v59
    %v90 = vunpack.c.h.b16 %v59
    %v91 = vunpack.c.l.b16 %v60
    %v92 = vunpack.c.h.b16 %v60
    %v93 = vunpack.c.l.b16 %v61
    %v94 = vunpack.c.h.b16 %v61
    %v95 = vunpack.c.l.b16 %v62
    %v96 = vunpack.c.h.b16 %v62
    %v97 = vpack.c.b16 %v85, %v81
    %v98 = vpack.c.b16 %v86, %v82
    %v99 = vpack.c.b16 %v87, %v83
    %v100 = vpack.c.b16 %v88, %v84
    %v101 = vpack.c.b16 %v93, %v89
    %v102 = vpack.c.b16 %v94, %v90
    %v103 = vpack.c.b16 %v95, %v91
    %v104 = vpack.c.b16 %v96, %v92
    %vm113 = vcmask 261120
    %v115 = vsel %vm113, %v54, 0
    %117 = vmatpush.bf16.msra.mxu0 0
    %118 = vmatpush.bf16.msra.mxu0 0
    %119 = vmatpush.bf16.msra.mxu0 0
    %120 = vmatpush.bf16.msra.mxu0 0
    %121 = vmatpush.bf16.msra.mxu0 0
    %122 = vmatpush.bf16.msra.mxu0 0
    %123 = vmatpush.bf16.msra.mxu0 %v101
    %124 = vmatpush.bf16.msra.mxu0 %v97
    %125 = vmatmul.bf16.gmra.mxu0 %v115
    %v126 = vpop.f32.mrf.mxu0
    %v127 = vadd.f32 %v65, %v126
    %v128 = vpop.f32.mrf.mxu0
    %129 = vdwg.mxu0
    %130 = vmatpush.bf16.msra.mxu0 0
    %131 = vmatpush.bf16.msra.mxu0 0
    %132 = vmatpush.bf16.msra.mxu0 0
    %133 = vmatpush.bf16.msra.mxu0 0
    %134 = vmatpush.bf16.msra.mxu0 0
    %135 = vmatpush.bf16.msra.mxu0 0
    %136 = vmatpush.bf16.msra.mxu0 %v102
    %137 = vmatpush.bf16.msra.mxu0 %v98
    %138 = vmatmul.bf16.gmra.mxu0 %v115
    %v139 = vpop.f32.mrf.mxu0
    %v140 = vadd.f32 %v66, %v139
    %v141 = vpop.f32.mrf.mxu0
    %142 = vdwg.mxu0
    %143 = vmatpush.bf16.msra.mxu0 0
    %144 = vmatpush.bf16.msra.mxu0 0
    %145 = vmatpush.bf16.msra.mxu0 0
    %146 = vmatpush.bf16.msra.mxu0 0
    %147 = vmatpush.bf16.msra.mxu0 0
    %148 = vmatpush.bf16.msra.mxu0 0
    %149 = vmatpush.bf16.msra.mxu0 %v103
    %150 = vmatpush.bf16.msra.mxu0 %v99
    %151 = vmatmul.bf16.gmra.mxu0 %v115
    %v152 = vpop.f32.mrf.mxu0
    %v153 = vadd.f32 %v67, %v152
    %v154 = vpop.f32.mrf.mxu0
    %155 = vdwg.mxu0
    %156 = vmatpush.bf16.msra.mxu0 0
    %157 = vmatpush.bf16.msra.mxu0 0
    %158 = vmatpush.bf16.msra.mxu0 0
    %159 = vmatpush.bf16.msra.mxu0 0
    %160 = vmatpush.bf16.msra.mxu0 0
    %161 = vmatpush.bf16.msra.mxu0 0
    %162 = vmatpush.bf16.msra.mxu0 %v104
    %163 = vmatpush.bf16.msra.mxu0 %v100
    %164 = vmatmul.bf16.gmra.mxu0 %v115
    %v165 = vpop.f32.mrf.mxu0
    %v166 = vadd.f32 %v68, %v165
    %v167 = vpop.f32.mrf.mxu0
    %168 = vdwg.mxu0
    %v169 = vmax.f32 %v127, 0.0
    %v170 = vmax.f32 %v140, 0.0
    %v171 = vmax.f32 %v153, 0.0
    %v172 = vmax.f32 %v166, 0.0
    %v173 = vpack.c.bf16 %v169, %v169
    %v174 = vpack.c.bf16 %v170, %v170
    %v175 = vpack.c.bf16 %v171, %v171
    %v176 = vpack.c.bf16 %v172, %v172
    %v177 = vld [vmem:[#allocation4] sm:$0xf]
    %v178 = vld [vmem:[#allocation4 + $0x4] sm:$0xf]
    %v179 = vld [vmem:[#allocation4 + $0x8] sm:$0xf]
    %v180 = vld [vmem:[#allocation4 + $0xc] sm:$0xf]
    %v181 = vld [vmem:[#allocation4 + $0x10] sm:$0xf]
    %v182 = vld [vmem:[#allocation4 + $0x14] sm:$0xf]
    %v183 = vld [vmem:[#allocation4 + $0x18] sm:$0xf]
    %v184 = vld [vmem:[#allocation4 + $0x1c] sm:$0xf]
    %v185 = vld [vmem:[#allocation4 + $0x20] sm:$0xf]
    %v186 = vld [vmem:[#allocation4 + $0x24] sm:$0xf]
    %v187 = vld [vmem:[#allocation4 + $0x28] sm:$0xf]
    %v188 = vld [vmem:[#allocation4 + $0x2c] sm:$0xf]
    %v189 = vld [vmem:[#allocation4 + $0x30] sm:$0xf]
    %v190 = vld [vmem:[#allocation4 + $0x34] sm:$0xf]
    %v191 = vld [vmem:[#allocation4 + $0x38] sm:$0xf]
    %v192 = vld [vmem:[#allocation4 + $0x3c] sm:$0xf]
    %v193 = vld [vmem:[#allocation4 + $0x40] sm:$0xf]
    %v194 = vld [vmem:[#allocation4 + $0x44] sm:$0xf]
    %v195 = vld [vmem:[#allocation4 + $0x48] sm:$0xf]
    %v196 = vld [vmem:[#allocation4 + $0x4c] sm:$0xf]
    %v197 = vld [vmem:[#allocation4 + $0x50] sm:$0xf]
    %v198 = vld [vmem:[#allocation4 + $0x54] sm:$0xf]
    %v199 = vld [vmem:[#allocation4 + $0x58] sm:$0xf]
    %v200 = vld [vmem:[#allocation4 + $0x5c] sm:$0xf]
    %v201 = vld [vmem:[#allocation4 + $0x60] sm:$0xf]
    %v202 = vld [vmem:[#allocation4 + $0x64] sm:$0xf]
    %v203 = vld [vmem:[#allocation4 + $0x68] sm:$0xf]
    %v204 = vld [vmem:[#allocation4 + $0x6c] sm:$0xf]
    %v205 = vld [vmem:[#allocation4 + $0x70] sm:$0xf]
    %v206 = vld [vmem:[#allocation4 + $0x74] sm:$0xf]
    %v207 = vld [vmem:[#allocation4 + $0x78] sm:$0xf]
    %v208 = vld [vmem:[#allocation4 + $0x7c] sm:$0xf]
    %v209 = vld [vmem:[#allocation4 + $0x80] sm:$0xf]
    %v210 = vld [vmem:[#allocation4 + $0x84] sm:$0xf]
    %v211 = vld [vmem:[#allocation4 + $0x88] sm:$0xf]
    %v212 = vld [vmem:[#allocation4 + $0x8c] sm:$0xf]
    %v213 = vld [vmem:[#allocation4 + $0x90] sm:$0xf]
    %v214 = vld [vmem:[#allocation4 + $0x94] sm:$0xf]
    %v215 = vld [vmem:[#allocation4 + $0x98] sm:$0xf]
    %v216 = vld [vmem:[#allocation4 + $0x9c] sm:$0xf]
    %v217 = vld [vmem:[#allocation4 + $0xa0] sm:$0xf]
    %v218 = vld [vmem:[#allocation4 + $0xa4] sm:$0xf]
    %v219 = vld [vmem:[#allocation4 + $0xa8] sm:$0xf]
    %v220 = vld [vmem:[#allocation4 + $0xac] sm:$0xf]
    %v221 = vld [vmem:[#allocation4 + $0xb0] sm:$0xf]
    %v222 = vld [vmem:[#allocation4 + $0xb4] sm:$0xf]
    %v223 = vld [vmem:[#allocation4 + $0xb8] sm:$0xf]
    %v224 = vld [vmem:[#allocation4 + $0xbc] sm:$0xf]
    %v225 = vld [vmem:[#allocation4 + $0xc0] sm:$0xf]
    %v226 = vld [vmem:[#allocation4 + $0xc4] sm:$0xf]
    %v227 = vld [vmem:[#allocation4 + $0xc8] sm:$0xf]
    %v228 = vld [vmem:[#allocation4 + $0xcc] sm:$0xf]
    %v229 = vld [vmem:[#allocation4 + $0xd0] sm:$0xf]
    %v230 = vld [vmem:[#allocation4 + $0xd4] sm:$0xf]
    %v231 = vld [vmem:[#allocation4 + $0xd8] sm:$0xf]
    %v232 = vld [vmem:[#allocation4 + $0xdc] sm:$0xf]
    %v233 = vld [vmem:[#allocation4 + $0xe0] sm:$0xf]
    %v234 = vld [vmem:[#allocation4 + $0xe4] sm:$0xf]
    %v235 = vld [vmem:[#allocation4 + $0xe8] sm:$0xf]
    %v236 = vld [vmem:[#allocation4 + $0xec] sm:$0xf]
    %v237 = vld [vmem:[#allocation4 + $0xf0] sm:$0xf]
    %v238 = vld [vmem:[#allocation4 + $0xf4] sm:$0xf]
    %v239 = vld [vmem:[#allocation4 + $0xf8] sm:$0xf]
    %v240 = vld [vmem:[#allocation4 + $0xfc] sm:$0xf]
    %v241 = vld [vmem:[%s4] sm:$0x1]
    %v243 = vperm.slane %v241, 0
    %v309 = vunpack.c.l.b16 %v177
    %v310 = vunpack.c.l.b16 %v178
    %v311 = vunpack.c.l.b16 %v179
    %v312 = vunpack.c.l.b16 %v180
    %v313 = vunpack.c.l.b16 %v181
    %v314 = vunpack.c.l.b16 %v182
    %v315 = vunpack.c.l.b16 %v183
    %v316 = vunpack.c.l.b16 %v184
    %v317 = vunpack.c.l.b16 %v185
    %v318 = vunpack.c.l.b16 %v186
    %v319 = vunpack.c.l.b16 %v187
    %v320 = vunpack.c.l.b16 %v188
    %v321 = vunpack.c.l.b16 %v189
    %v322 = vunpack.c.l.b16 %v190
    %v323 = vunpack.c.l.b16 %v191
    %v324 = vunpack.c.l.b16 %v192
    %v325 = vunpack.c.l.b16 %v193
    %v326 = vunpack.c.l.b16 %v194
    %v327 = vunpack.c.l.b16 %v195
    %v328 = vunpack.c.l.b16 %v196
    %v329 = vunpack.c.l.b16 %v197
    %v330 = vunpack.c.l.b16 %v198
    %v331 = vunpack.c.l.b16 %v199
    %v332 = vunpack.c.l.b16 %v200
    %v333 = vunpack.c.l.b16 %v201
    %v334 = vunpack.c.l.b16 %v202
    %v335 = vunpack.c.l.b16 %v203
    %v336 = vunpack.c.l.b16 %v204
    %v337 = vunpack.c.l.b16 %v205
    %v338 = vunpack.c.l.b16 %v206
    %v339 = vunpack.c.l.b16 %v207
    %v340 = vunpack.c.l.b16 %v208
    %v341 = vunpack.c.l.b16 %v209
    %v342 = vunpack.c.l.b16 %v210
    %v343 = vunpack.c.l.b16 %v211
    %v344 = vunpack.c.l.b16 %v212
    %v345 = vunpack.c.l.b16 %v213
    %v346 = vunpack.c.l.b16 %v214
    %v347 = vunpack.c.l.b16 %v215
    %v348 = vunpack.c.l.b16 %v216
    %v349 = vunpack.c.l.b16 %v217
    %v350 = vunpack.c.l.b16 %v218
    %v351 = vunpack.c.l.b16 %v219
    %v352 = vunpack.c.l.b16 %v220
    %v353 = vunpack.c.l.b16 %v221
    %v354 = vunpack.c.l.b16 %v222
    %v355 = vunpack.c.l.b16 %v223
    %v356 = vunpack.c.l.b16 %v224
    %v357 = vunpack.c.l.b16 %v225
    %v358 = vunpack.c.l.b16 %v226
    %v359 = vunpack.c.l.b16 %v227
    %v360 = vunpack.c.l.b16 %v228
    %v361 = vunpack.c.l.b16 %v229
    %v362 = vunpack.c.l.b16 %v230
    %v363 = vunpack.c.l.b16 %v231
    %v364 = vunpack.c.l.b16 %v232
    %v365 = vunpack.c.l.b16 %v233
    %v366 = vunpack.c.l.b16 %v234
    %v367 = vunpack.c.l.b16 %v235
    %v368 = vunpack.c.l.b16 %v236
    %v369 = vunpack.c.l.b16 %v237
    %v370 = vunpack.c.l.b16 %v238
    %v371 = vunpack.c.l.b16 %v239
    %v372 = vunpack.c.l.b16 %v240
    %v373 = vpack.c.b16 %v310, %v309
    %v374 = vpack.c.b16 %v312, %v311
    %v375 = vpack.c.b16 %v314, %v313
    %v376 = vpack.c.b16 %v316, %v315
    %v377 = vpack.c.b16 %v318, %v317
    %v378 = vpack.c.b16 %v320, %v319
    %v379 = vpack.c.b16 %v322, %v321
    %v380 = vpack.c.b16 %v324, %v323
    %v381 = vpack.c.b16 %v326, %v325
    %v382 = vpack.c.b16 %v328, %v327
    %v383 = vpack.c.b16 %v330, %v329
    %v384 = vpack.c.b16 %v332, %v331
    %v385 = vpack.c.b16 %v334, %v333
    %v386 = vpack.c.b16 %v336, %v335
    %v387 = vpack.c.b16 %v338, %v337
    %v388 = vpack.c.b16 %v340, %v339
    %v389 = vpack.c.b16 %v342, %v341
    %v390 = vpack.c.b16 %v344, %v343
    %v391 = vpack.c.b16 %v346, %v345
    %v392 = vpack.c.b16 %v348, %v347
    %v393 = vpack.c.b16 %v350, %v349
    %v394 = vpack.c.b16 %v352, %v351
    %v395 = vpack.c.b16 %v354, %v353
    %v396 = vpack.c.b16 %v356, %v355
    %v397 = vpack.c.b16 %v358, %v357
    %v398 = vpack.c.b16 %v360, %v359
    %v399 = vpack.c.b16 %v362, %v361
    %v400 = vpack.c.b16 %v364, %v363
    %v401 = vpack.c.b16 %v366, %v365
    %v402 = vpack.c.b16 %v368, %v367
    %v403 = vpack.c.b16 %v370, %v369
    %v404 = vpack.c.b16 %v372, %v371
    %437 = vmatpush.bf16.msra.mxu0 %v380
    %438 = vmatpush.bf16.msra.mxu0 %v379
    %439 = vmatpush.bf16.msra.mxu0 %v378
    %440 = vmatpush.bf16.msra.mxu0 %v377
    %441 = vmatpush.bf16.msra.mxu0 %v376
    %442 = vmatpush.bf16.msra.mxu0 %v375
    %443 = vmatpush.bf16.msra.mxu0 %v374
    %444 = vmatpush.bf16.msra.mxu0 %v373
    %445 = vmatmul.bf16.gmra.mxu0 %v173
    %v446 = vpop.f32.mrf.mxu0
    %v447 = vadd.f32 %v243, %v446
    %v448 = vpop.f32.mrf.mxu0
    %449 = vdwg.mxu0
    %450 = vmatpush.bf16.msra.mxu0 %v388
    %451 = vmatpush.bf16.msra.mxu0 %v387
    %452 = vmatpush.bf16.msra.mxu0 %v386
    %453 = vmatpush.bf16.msra.mxu0 %v385
    %454 = vmatpush.bf16.msra.mxu0 %v384
    %455 = vmatpush.bf16.msra.mxu0 %v383
    %456 = vmatpush.bf16.msra.mxu0 %v382
    %457 = vmatpush.bf16.msra.mxu0 %v381
    %458 = vmatmul.bf16.gmra.mxu0 %v174
    %v459 = vpop.f32.mrf.mxu0
    %v460 = vadd.f32 %v447, %v459
    %v461 = vpop.f32.mrf.mxu0
    %462 = vdwg.mxu0
    %463 = vmatpush.bf16.msra.mxu0 %v396
    %464 = vmatpush.bf16.msra.mxu0 %v395
    %465 = vmatpush.bf16.msra.mxu0 %v394
    %466 = vmatpush.bf16.msra.mxu0 %v393
    %467 = vmatpush.bf16.msra.mxu0 %v392
    %468 = vmatpush.bf16.msra.mxu0 %v391
    %469 = vmatpush.bf16.msra.mxu0 %v390
    %470 = vmatpush.bf16.msra.mxu0 %v389
    %471 = vmatmul.bf16.gmra.mxu0 %v175
    %v472 = vpop.f32.mrf.mxu0
    %v473 = vadd.f32 %v460, %v472
    %v474 = vpop.f32.mrf.mxu0
    %475 = vdwg.mxu0
    %476 = vmatpush.bf16.msra.mxu0 %v404
    %477 = vmatpush.bf16.msra.mxu0 %v403
    %478 = vmatpush.bf16.msra.mxu0 %v402
    %479 = vmatpush.bf16.msra.mxu0 %v401
    %480 = vmatpush.bf16.msra.mxu0 %v400
    %481 = vmatpush.bf16.msra.mxu0 %v399
    %482 = vmatpush.bf16.msra.mxu0 %v398
    %483 = vmatpush.bf16.msra.mxu0 %v397
    %484 = vmatmul.bf16.gmra.mxu0 %v176
    %v485 = vpop.f32.mrf.mxu0
    %v486 = vadd.f32 %v473, %v485
    %v487 = vpop.f32.mrf.mxu0
    %488 = vdwg.mxu0
    %489 = vst [vmem:[%s5] sm:$0xff] %v486
    // Predicated region
    $region30: #{forward.1} parent=1 // pred_check
      _
    $region31: #{forward.1} parent=1 // pred_check_branch
      %491 = sbr.rel (0) target = $region33
    $region32: #{forward.1} parent=1 // pred_region
      _
    $region33: #{forward.1} parent=1 // pred_fallthru
      _
    // Predicated region
    $region34: #{forward.1} parent=1 // pred_check
      _
    $region35: #{forward.1} parent=1 // pred_check_branch
      %493 = sbr.rel (0) target = $region37
    $region36: #{forward.1} parent=1 // pred_region
      _
    $region37: #{forward.1} parent=1 // pred_fallthru
      _
    %494 = vsyncpa [#allocation3], 1
    %495 = vsyncpa [#allocation5], 1

</llo_original>
